<compile_context>
chip_gen: v7x
topology: tpu7x:2x2x1
jax: 0.10.0
libtpu: 0.0.40
codegen_flags: <defaults>
</compile_context>

<pallas_src>
import functools

import jax
import jax.numpy as jnp
from jax.experimental import pallas as pl
from jax.experimental.pallas import tpu as pltpu

_NUM_CORE_SPLITS = 2  # leading "parallel" grid axis (uses both TCs on v7x)


# --------------------------------------------------------------------------
# Pallas kernel
# --------------------------------------------------------------------------
def _equiv_update_kernel(
    pre1_ref,     # [TE, H_pad]  bf16  layer-1 pre-activation (incl. bias)
    side_ref,     # [TE, 8]      f32   cols 0-2: coord_diff*edge_mask,
                  #                    col 3: 1.0 (count), col 4: row id (float)
    w2_ref,       # [H_pad, H_pad] bf16
    b2_ref,       # [1, H_pad]   f32
    w3_ref,       # [1, H_pad]   f32   final projection as a row
    out_ref,      # [8, N_pad]   f32   per-core partial sums (rows 0-2 trans, 3 count)
    acc_ref,      # [8, N_pad]   f32   VMEM scratch accumulator
    *,
    use_tanh: bool,
    coords_range: float,
    node_chunk: int,
):
    t = pl.program_id(1)

    @pl.when(t == 0)
    def _init():
        acc_ref[...] = jnp.zeros_like(acc_ref)

    # ---- coord_mlp on this edge tile: SiLU -> Linear -> SiLU -> Linear(H,1)
    x = pre1_ref[...]                                      # [TE, H_pad] bf16
    h1 = x * jax.nn.sigmoid(x)                             # bf16 SiLU (VPU/EUP)
    h2 = jnp.dot(h1, w2_ref[...],
                 preferred_element_type=jnp.float32) + b2_ref[...]
    h2 = h2 * jax.nn.sigmoid(h2)                           # f32 SiLU
    # Final 1-wide projection as VPU multiply + lane reduction (not MXU).
    s = jnp.sum(h2 * w3_ref[...], axis=-1, keepdims=True)  # [TE, 1] f32
    if use_tanh:
        s = jnp.tanh(s) * coords_range

    # ---- per-edge payload: cols 0-2 = coord_diff*edge_mask*s, col 3 = count.
    side = side_ref[...]                                   # [TE, 8] f32
    lane = jax.lax.broadcasted_iota(jnp.int32, side.shape, 1)
    mult = jnp.where(lane < 3, s, jnp.where(lane == 3, 1.0, 0.0))
    payload = side * mult                                  # [TE, 8] f32 (cols>=4 zero)

    # hi/lo bf16 split -> one stacked [TE, 16] LHS gives ~f32-exact scatter
    # while keeping the MXU in native bf16 (no f32 emulation passes).
    hi = payload.astype(jnp.bfloat16)
    lo = (payload - hi.astype(jnp.float32)).astype(jnp.bfloat16)
    payload16 = jnp.concatenate([hi, lo], axis=1)          # [TE, 16] bf16

    row = side[:, 4:5].astype(jnp.int32)                   # [TE, 1] segment ids

    # ---- node-chunked one-hot scatter: payload16^T @ onehot -> [16, chunk].
    # Chunking bounds the [TE, chunk] intermediate (VMEM/vreg pressure).
    n_pad = acc_ref.shape[1]
    c0 = 0
    while c0 < n_pad:
        sz = min(node_chunk, n_pad - c0)
        nid = c0 + jax.lax.broadcasted_iota(jnp.int32, (1, sz), 1)
        onehot = (row == nid).astype(jnp.bfloat16)         # [TE, sz] (0/1 exact)
        r = jax.lax.dot_general(
            payload16, onehot,
            dimension_numbers=(((0,), (0,)), ((), ())),
            preferred_element_type=jnp.float32)            # [16, sz] f32
        acc_ref[:, c0:c0 + sz] += r[0:8] + r[8:16]
        c0 += sz

    @pl.when(t == pl.num_programs(1) - 1)
    def _flush():
        out_ref[...] = acc_ref[...]


# --------------------------------------------------------------------------
# Wrapper
# --------------------------------------------------------------------------
def equivariant_update(
    params,
    h,            # [N, H]
    coord,        # [N, 3]
    edge_index,   # (row [E], col [E]) int32
    coord_diff,   # [E, 3]
    edge_attr,    # [E, edges_in_d]
    rgroup_mask=None,   # [N, 1] or None
    node_mask=None,     # [N, 1] or None
    edge_mask=None,     # [E, 1] or None
    *,
    tanh=False,
    coords_range=10.0,
    normalization_factor=100.0,
    aggregation_method="sum",
    edge_tile=1024,     # multiple of 16 (bf16 sublane packing)
    node_chunk=2048,    # lane chunk for the one-hot scatter (multiple of 128)
):
    row, col = edge_index
    N = coord.shape[0]
    E = row.shape[0]
    H = h.shape[1]

    assert edge_tile % 16 == 0 and node_chunk % 128 == 0
    TE = int(edge_tile)
    H_pad = ((H + 127) // 128) * 128
    N_pad = ((N + 127) // 128) * 128
    n_tiles = max(1, (E + TE - 1) // TE)
    ntpc = (n_tiles + _NUM_CORE_SPLITS - 1) // _NUM_CORE_SPLITS
    E_pad = _NUM_CORE_SPLITS * ntpc * TE

    h = h.astype(jnp.float32)
    coord = coord.astype(jnp.float32)
    coord_diff = coord_diff.astype(jnp.float32)
    edge_attr = edge_attr.astype(jnp.float32)
    if edge_mask is None:
        edge_mask = jnp.ones((E, 1), jnp.float32)
    if rgroup_mask is None:
        rgroup_mask = jnp.ones((N, 1), jnp.float32)
    if node_mask is None:
        node_mask = jnp.ones((N, 1), jnp.float32)

    # ---- XLA glue: layer-1 split + gather (data-dependent gather stays here).
    w1 = params["w1"].astype(jnp.float32)            # [2H+d, H]
    p_src = h @ w1[:H]                               # [N, H]
    p_dst = h @ w1[H:2 * H]                          # [N, H]
    pre1 = (p_src[row] + p_dst[col]
            + edge_attr @ w1[2 * H:]
            + params["b1"].astype(jnp.float32))      # [E, H]
    pre1 = jnp.pad(pre1, ((0, E_pad - E), (0, H_pad - H))).astype(jnp.bfloat16)

    # Packed per-edge side data: cdm(3), count(1), row-id-as-float(1).
    cdm = coord_diff * edge_mask.astype(jnp.float32)
    edge_side = jnp.zeros((E_pad, 8), jnp.float32)
    edge_side = edge_side.at[:E, 0:3].set(cdm)
    edge_side = edge_side.at[:E, 3].set(1.0)                           # count
    edge_side = edge_side.at[:, 4].set(float(N_pad))                   # OOR default
    edge_side = edge_side.at[:E, 4].set(row.astype(jnp.float32))       # segment id

    # Zero-padded weights (padding is exact through SiLU: silu(0)=0).
    w2 = jnp.pad(params["w2"].astype(jnp.float32),
                 ((0, H_pad - H), (0, H_pad - H))).astype(jnp.bfloat16)
    b2 = jnp.pad(params["b2"].astype(jnp.float32), ((0, 0), (0, H_pad - H)))
    w3row = jnp.pad(params["w3"].astype(jnp.float32).T,
                    ((0, 0), (0, H_pad - H)))                          # [1, H_pad]

    nchunk = int(min(node_chunk, N_pad))

    kernel = functools.partial(
        _equiv_update_kernel,
        use_tanh=bool(tanh),
        coords_range=float(coords_range),
        node_chunk=nchunk,
    )

    # VMEM budget: streamed tiles + resident weights + slabs + scatter chunk.
    vmem_est = (
        2 * TE * H_pad * 2            # pre1 double buffer (bf16)
        + 2 * TE * 128 * 4            # side tiles (lanes padded to 128)
        + 2 * H_pad * H_pad * 2       # w2
        + 4 * 8 * H_pad * 4           # b2 / w3
        + 2 * 8 * N_pad * 4           # output block buffers
        + 8 * N_pad * 4               # acc scratch
        + 2 * TE * nchunk * 2         # one-hot chunk + staging
        + 6 * TE * H_pad * 4          # activation intermediates headroom
    )
    vmem_limit = int(min(max(vmem_est + (4 << 20), 16 << 20), 48 << 20))

    partials = pl.pallas_call(
        kernel,
        out_shape=jax.ShapeDtypeStruct((_NUM_CORE_SPLITS, 8, N_pad), jnp.float32),
        grid=(_NUM_CORE_SPLITS, ntpc),
        in_specs=[
            pl.BlockSpec((TE, H_pad), lambda c, t: (c * ntpc + t, 0)),   # pre1
            pl.BlockSpec((TE, 8), lambda c, t: (c * ntpc + t, 0)),       # side
            pl.BlockSpec((H_pad, H_pad), lambda c, t: (0, 0)),           # w2
            pl.BlockSpec((1, H_pad), lambda c, t: (0, 0)),               # b2
            pl.BlockSpec((1, H_pad), lambda c, t: (0, 0)),               # w3 row
        ],
        out_specs=pl.BlockSpec((None, 8, N_pad), lambda c, t: (c, 0, 0)),
        scratch_shapes=[pltpu.VMEM((8, N_pad), jnp.float32)],
        compiler_params=pltpu.CompilerParams(
            dimension_semantics=("parallel", "arbitrary"),  # edge axis = reduction
            vmem_limit_bytes=vmem_limit,
        ),
    )(pre1, edge_side, w2, b2, w3row)

    # ---- tiny XLA finalize (global over both core-partials): normalize,
    # rgroup mask, coord +=, node mask.
    slab = partials[0] + partials[1]                       # [8, N_pad]
    agg = slab[0:3, :N].T                                  # [N, 3]
    if aggregation_method == "sum":
        agg = agg / normalization_factor
    elif aggregation_method == "mean":
        cnt = slab[3:4, :N].T                              # [N, 1]
        cnt = jnp.where(cnt == 0.0, 1.0, cnt)
        agg = agg / cnt
    agg = agg * rgroup_mask.astype(jnp.float32)
    return (coord + agg) * node_mask.astype(jnp.float32)


# --------------------------------------------------------------------------
# Deterministic parameter init (mirrors nn.Linear shapes from __init__)
# --------------------------------------------------------------------------
def make_params(key, hidden_nf, edges_in_d=1):
    input_edge = hidden_nf * 2 + edges_in_d
    k1, k2, k3, k4, k5 = jax.random.split(key, 5)

    def lin_init(k, fan_in, fan_out):
        bound = 1.0 / jnp.sqrt(fan_in)
        return jax.random.uniform(k, (fan_in, fan_out), jnp.float32, -bound, bound)

    gain = 0.001  # final layer: xavier_uniform with gain=0.001, no bias
    bound3 = gain * jnp.sqrt(6.0 / (hidden_nf + 1))
    return {
        "w1": lin_init(k1, input_edge, hidden_nf),
        "b1": jax.random.uniform(k2, (1, hidden_nf), jnp.float32, -1.0, 1.0)
        / jnp.sqrt(input_edge),
        "w2": lin_init(k3, hidden_nf, hidden_nf),
        "b2": jax.random.uniform(k4, (1, hidden_nf), jnp.float32, -1.0, 1.0)
        / jnp.sqrt(hidden_nf),
        "w3": jax.random.uniform(k5, (hidden_nf, 1), jnp.float32, -bound3, bound3),
    }


# --------------------------------------------------------------------------
# Pure-JAX reference (f32) for correctness check
# --------------------------------------------------------------------------
def reference(params, h, coord, edge_index, coord_diff, edge_attr,
              rgroup_mask, node_mask, edge_mask, *,
              tanh, coords_range, normalization_factor, aggregation_method):
    row, col = edge_index
    N = coord.shape[0]
    inp = jnp.concatenate([h[row], h[col], edge_attr], axis=1)
    h1 = jax.nn.silu(inp @ params["w1"] + params["b1"])
    h2 = jax.nn.silu(h1 @ params["w2"] + params["b2"])
    s = h2 @ params["w3"]
    if tanh:
        s = jnp.tanh(s) * coords_range
    trans = coord_diff * s
    trans = trans * edge_mask
    agg = jax.ops.segment_sum(trans, row, num_segments=N)
    if aggregation_method == "sum":
        agg = agg / normalization_factor
    else:
        cnt = jax.ops.segment_sum(jnp.ones_like(trans), row, num_segments=N)
        cnt = jnp.where(cnt == 0, 1.0, cnt)
        agg = agg / cnt
    agg = agg * rgroup_mask
    c = coord + agg
    return c * node_mask


# --------------------------------------------------------------------------
if __name__ == "__main__":
    key = jax.random.PRNGKey(0)
    hidden_nf = 32
    edges_in_d = 1
    N = 8                        # nodes
    # fully-connected directed edges without self loops -> E = 56
    src, dst = jnp.meshgrid(jnp.arange(N), jnp.arange(N), indexing="ij")
    keep = src.ravel() != dst.ravel()
    row = src.ravel()[keep].astype(jnp.int32)
    col = dst.ravel()[keep].astype(jnp.int32)
    E = int(row.shape[0])

    kp, kh, kc, ka = jax.random.split(key, 4)
    params = make_params(kp, hidden_nf, edges_in_d)
    h = jax.random.normal(kh, (N, hidden_nf), jnp.float32)
    coord = jax.random.normal(kc, (N, 3), jnp.float32)
    coord_diff = coord[row] - coord[col]
    edge_attr = jax.random.normal(ka, (E, edges_in_d), jnp.float32)
    edge_mask = jnp.ones((E, 1), jnp.float32)
    rgroup_mask = jnp.ones((N, 1), jnp.float32)
    node_mask = jnp.ones((N, 1), jnp.float32)

    runs = [
        # small tile -> exercises multi-step accumulation on both core splits
        (dict(tanh=False, coords_range=10.0, normalization_factor=1.0,
              aggregation_method="sum"), dict(edge_tile=16)),
        (dict(tanh=True, coords_range=10.0, normalization_factor=1.0,
              aggregation_method="mean"), dict(edge_tile=16)),
        # default (large) tile -> exercises heavy edge padding path
        (dict(tanh=False, coords_range=10.0, normalization_factor=1.0,
              aggregation_method="sum"), dict()),
    ]
    for cfg, tiling in runs:
        out = equivariant_update(
            params, h, coord, (row, col), coord_diff, edge_attr,
            rgroup_mask, node_mask, edge_mask, **tiling, **cfg)
        out = jax.block_until_ready(out)
        ref = reference(params, h, coord, (row, col), coord_diff, edge_attr,
                        rgroup_mask, node_mask, edge_mask, **cfg)
        assert out.shape == ref.shape
        err = float(jnp.max(jnp.abs(out - ref)))
        assert err < 1e-4, f"mismatch vs reference: max abs err {err} ({cfg}, {tiling})"

    print("KERNEL_OK")
</pallas_src>

<mosaic_0001>
module attributes {stable_mosaic.version = 11 : i64} {
  func.func @_equiv_update_kernel(%arg0: i32, %arg1: i32, %arg2: memref<16x128xbf16, #tpu.memory_space<vmem>>, %arg3: memref<16x8xf32, #tpu.memory_space<vmem>>, %arg4: memref<128x128xbf16, #tpu.memory_space<vmem>>, %arg5: memref<1x128xf32, #tpu.memory_space<vmem>>, %arg6: memref<1x128xf32, #tpu.memory_space<vmem>>, %arg7: memref<1x8x128xf32, #tpu.memory_space<vmem>>, %arg8: memref<8x128xf32, #tpu.memory_space<vmem>>) attributes {dimension_semantics = [#tpu.dimension_semantics<parallel>, #tpu.dimension_semantics<arbitrary>], iteration_bounds = array<i64: 2, 2>, scalar_prefetch = 0 : i64, scratch_operands = 1 : i64, tpu.core_type = #tpu.core_type<tc>, window_params = [{transform_indices = @transform_0, window_bounds = array<i64: 16, 128>}, {transform_indices = @transform_1, window_bounds = array<i64: 16, 8>}, {pipeline_mode = #tpu.pipeline_mode<synchronous>, transform_indices = @transform_2, window_bounds = array<i64: 128, 128>}, {pipeline_mode = #tpu.pipeline_mode<synchronous>, transform_indices = @transform_3, window_bounds = array<i64: 1, 128>}, {pipeline_mode = #tpu.pipeline_mode<synchronous>, transform_indices = @transform_4, window_bounds = array<i64: 1, 128>}, {transform_indices = @transform_5, window_bounds = array<i64: 1, 8, 128>}]} {
    %c0_i32 = arith.constant 0 : i32
    %0 = arith.cmpi eq, %arg1, %c0_i32 : i32
    %1 = arith.extui %0 : i1 to i32
    %c0_i32_0 = arith.constant 0 : i32
    %2 = arith.cmpi ne, %1, %c0_i32_0 : i32
    scf.if %2 {
      %cst_23 = arith.constant 0.000000e+00 : f32
      %65 = vector.broadcast %cst_23 : f32 to vector<8x128xf32>
      %c0_24 = arith.constant 0 : index
      %c0_25 = arith.constant 0 : index
      %66 = vector.load %arg8[%c0_24, %c0_25] : memref<8x128xf32, #tpu.memory_space<vmem>>, vector<8x128xf32>
      tpu.vector_store %arg8[%c0_24, %c0_25], %65 {strides = array<i32>} : memref<8x128xf32, #tpu.memory_space<vmem>>, vector<8x128xf32>,
    } else {
    }
    %c0 = arith.constant 0 : index
    %c0_1 = arith.constant 0 : index
    %3 = vector.load %arg2[%c0, %c0_1] : memref<16x128xbf16, #tpu.memory_space<vmem>>, vector<16x128xbf16>
    %4 = arith.negf %3 : vector<16x128xbf16>
    %5 = math.exp %4 : vector<16x128xbf16>
    %cst = arith.constant 1.000000e+00 : bf16
    %6 = vector.broadcast %cst : bf16 to vector<16x128xbf16>
    %7 = arith.addf %6, %5 : vector<16x128xbf16>
    %8 = arith.divf %6, %7 : vector<16x128xbf16>
    %9 = arith.mulf %3, %8 : vector<16x128xbf16>
    %c0_2 = arith.constant 0 : index
    %c0_3 = arith.constant 0 : index
    %10 = vector.load %arg4[%c0_2, %c0_3] : memref<128x128xbf16, #tpu.memory_space<vmem>>, vector<128x128xbf16>
    %cst_4 = arith.constant dense<0.000000e+00> : vector<16x128xf32>
    %11 = tpu.matmul %9, %10, %cst_4 {dimension_numbers = #tpu.dot_dimension_numbers<[1], [0], [0], [1], [0, 0, 1, 1], [], []>} : vector<16x128xbf16>, vector<128x128xbf16>, vector<16x128xf32> -> vector<16x128xf32>
    %c0_5 = arith.constant 0 : index
    %c0_6 = arith.constant 0 : index
    %12 = vector.load %arg5[%c0_5, %c0_6] : memref<1x128xf32, #tpu.memory_space<vmem>>, vector<1x128xf32>
    %13 = vector.broadcast %12 : vector<1x128xf32> to vector<16x128xf32>
    %14 = arith.addf %11, %13 : vector<16x128xf32>
    %15 = arith.negf %14 : vector<16x128xf32>
    %16 = math.exp %15 : vector<16x128xf32>
    %cst_7 = arith.constant 1.000000e+00 : f32
    %17 = vector.broadcast %cst_7 : f32 to vector<16x128xf32>
    %18 = arith.addf %17, %16 : vector<16x128xf32>
    %19 = arith.divf %17, %18 : vector<16x128xf32>
    %20 = arith.mulf %14, %19 : vector<16x128xf32>
    %c0_8 = arith.constant 0 : index
    %c0_9 = arith.constant 0 : index
    %21 = vector.load %arg6[%c0_8, %c0_9] : memref<1x128xf32, #tpu.memory_space<vmem>>, vector<1x128xf32>
    %22 = vector.broadcast %21 : vector<1x128xf32> to vector<16x128xf32>
    %23 = arith.mulf %20, %22 : vector<16x128xf32>
    %cst_10 = arith.constant dense<0.000000e+00> : vector<16xf32>
    %24 = vector.multi_reduction <add>, %23, %cst_10 [1] : vector<16x128xf32> to vector<16xf32>
    %25 = vector.shape_cast %24 : vector<16xf32> to vector<16x1xf32>
    %c0_11 = arith.constant 0 : index
    %c0_12 = arith.constant 0 : index
    %26 = vector.load %arg3[%c0_11, %c0_12] : memref<16x8xf32, #tpu.memory_space<vmem>>, vector<16x8xf32>
    %27 = tpu.iota {dimensions = array<i32: 1>} : vector<16x8xi32>
    %c3_i32 = arith.constant 3 : i32
    %28 = vector.broadcast %c3_i32 : i32 to vector<16x8xi32>
    %29 = arith.cmpi slt, %27, %28 : vector<16x8xi32>
    %c3_i32_13 = arith.constant 3 : i32
    %30 = vector.broadcast %c3_i32_13 : i32 to vector<16x8xi32>
    %31 = arith.cmpi eq, %27, %30 : vector<16x8xi32>
    %cst_14 = arith.constant 1.000000e+00 : f32
    %cst_15 = arith.constant 0.000000e+00 : f32
    %32 = vector.broadcast %cst_14 : f32 to vector<16x8xf32>
    %33 = vector.broadcast %cst_15 : f32 to vector<16x8xf32>
    %34 = arith.select %31, %32, %33 : vector<16x8xi1>, vector<16x8xf32>
    %35 = vector.shape_cast %25 : vector<16x1xf32> to vector<16x1xf32>
    %36 = vector.broadcast %35 : vector<16x1xf32> to vector<16x8xf32>
    %37 = arith.select %29, %36, %34 : vector<16x8xi1>, vector<16x8xf32>
    %38 = arith.mulf %26, %37 : vector<16x8xf32>
    %39 = arith.truncf %38 : vector<16x8xf32> to vector<16x8xbf16>
    %40 = arith.extf %39 : vector<16x8xbf16> to vector<16x8xf32>
    %41 = arith.subf %38, %40 : vector<16x8xf32>
    %42 = arith.truncf %41 : vector<16x8xf32> to vector<16x8xbf16>
    %43 = tpu.concatenate %39, %42 in 1 : vector<16x8xbf16>, vector<16x8xbf16> -> vector<16x16xbf16>
    %44 = vector.extract_strided_slice %26 {offsets = [0, 4], sizes = [16, 1], strides = [1, 1]} : vector<16x8xf32> to vector<16x1xf32>
    %45 = arith.fptosi %44 : vector<16x1xf32> to vector<16x1xi32>
    %46 = tpu.iota {dimensions = array<i32: 1>} : vector<1x128xi32>
    %c0_i32_16 = arith.constant 0 : i32
    %47 = vector.broadcast %c0_i32_16 : i32 to vector<1x128xi32>
    %48 = arith.addi %47, %46 : vector<1x128xi32>
    %49 = vector.broadcast %45 : vector<16x1xi32> to vector<16x128xi32>
    %50 = vector.broadcast %48 : vector<1x128xi32> to vector<16x128xi32>
    %51 = arith.cmpi eq, %49, %50 : vector<16x128xi32>
    %52 = arith.extui %51 : vector<16x128xi1> to vector<16x128xi32>
    %53 = arith.sitofp %52 : vector<16x128xi32> to vector<16x128xf32>
    %54 = arith.truncf %53 : vector<16x128xf32> to vector<16x128xbf16>
    %cst_17 = arith.constant dense<0.000000e+00> : vector<16x128xf32>
    %55 = tpu.matmul %43, %54, %cst_17 {dimension_numbers = #tpu.dot_dimension_numbers<[0], [0], [1], [1], [0, 1, 1, 1], [], []>} : vector<16x16xbf16>, vector<16x128xbf16>, vector<16x128xf32> -> vector<16x128xf32>
    %c0_18 = arith.constant 0 : index
    %c0_19 = arith.constant 0 : index
    %56 = vector.load %arg8[%c0_18, %c0_19] : memref<8x128xf32, #tpu.memory_space<vmem>>, vector<8x128xf32>
    %57 = vector.extract_strided_slice %55 {offsets = [0, 0], sizes = [8, 128], strides = [1, 1]} : vector<16x128xf32> to vector<8x128xf32>
    %58 = vector.extract_strided_slice %55 {offsets = [8, 0], sizes = [8, 128], strides = [1, 1]} : vector<16x128xf32> to vector<8x128xf32>
    %59 = arith.addf %57, %58 : vector<8x128xf32>
    %60 = arith.addf %56, %59 : vector<8x128xf32>
    %c0_20 = arith.constant 0 : index
    %c0_21 = arith.constant 0 : index
    %61 = vector.load %arg8[%c0_20, %c0_21] : memref<8x128xf32, #tpu.memory_space<vmem>>, vector<8x128xf32>
    tpu.vector_store %arg8[%c0_20, %c0_21], %60 {strides = array<i32>} : memref<8x128xf32, #tpu.memory_space<vmem>>, vector<8x128xf32>,
    %c1_i32 = arith.constant 1 : i32
    %62 = arith.cmpi eq, %arg1, %c1_i32 : i32
    %63 = arith.extui %62 : i1 to i32
    %c0_i32_22 = arith.constant 0 : i32
    %64 = arith.cmpi ne, %63, %c0_i32_22 : i32
    scf.if %64 {
      %c0_23 = arith.constant 0 : index
      %c0_24 = arith.constant 0 : index
      %65 = vector.load %arg8[%c0_23, %c0_24] : memref<8x128xf32, #tpu.memory_space<vmem>>, vector<8x128xf32>
      %c0_25 = arith.constant 0 : index
      %c0_26 = arith.constant 0 : index
      %c0_27 = arith.constant 0 : index
      %66 = vector.load %arg7[%c0_25, %c0_26, %c0_27] : memref<1x8x128xf32, #tpu.memory_space<vmem>>, vector<1x8x128xf32>
      %67 = vector.shape_cast %66 : vector<1x8x128xf32> to vector<8x128xf32>
      %68 = vector.shape_cast %65 : vector<8x128xf32> to vector<1x8x128xf32>
      tpu.vector_store %arg7[%c0_25, %c0_26, %c0_27], %68 {strides = array<i32>} : memref<1x8x128xf32, #tpu.memory_space<vmem>>, vector<1x8x128xf32>,
    } else {
    }
    return
  }
  func.func @transform_0(%arg0: i32, %arg1: i32) -> (i32, i32) {
    %c2_i32 = arith.constant 2 : i32
    %0 = arith.muli %arg0, %c2_i32 : i32
    %1 = arith.addi %0, %arg1 : i32
    %c0_i32 = arith.constant 0 : i32
    %c0_i32_0 = arith.constant 0 : i32
    return %1, %c0_i32 : i32, i32
  }
  func.func @transform_1(%arg0: i32, %arg1: i32) -> (i32, i32) {
    %c2_i32 = arith.constant 2 : i32
    %0 = arith.muli %arg0, %c2_i32 : i32
    %1 = arith.addi %0, %arg1 : i32
    %c0_i32 = arith.constant 0 : i32
    %c0_i32_0 = arith.constant 0 : i32
    return %1, %c0_i32 : i32, i32
  }
  func.func @transform_2(%arg0: i32, %arg1: i32) -> (i32, i32) {
    %c0_i32 = arith.constant 0 : i32
    %c0_i32_0 = arith.constant 0 : i32
    %c0_i32_1 = arith.constant 0 : i32
    return %c0_i32, %c0_i32_0 : i32, i32
  }
  func.func @transform_3(%arg0: i32, %arg1: i32) -> (i32, i32) {
    %c0_i32 = arith.constant 0 : i32
    %c0_i32_0 = arith.constant 0 : i32
    %c0_i32_1 = arith.constant 0 : i32
    return %c0_i32, %c0_i32_0 : i32, i32
  }
  func.func @transform_4(%arg0: i32, %arg1: i32) -> (i32, i32) {
    %c0_i32 = arith.constant 0 : i32
    %c0_i32_0 = arith.constant 0 : i32
    %c0_i32_1 = arith.constant 0 : i32
    return %c0_i32, %c0_i32_0 : i32, i32
  }
  func.func @transform_5(%arg0: i32, %arg1: i32) -> (i32, i32, i32) {
    %c0_i32 = arith.constant 0 : i32
    %c0_i32_0 = arith.constant 0 : i32
    %c0_i32_1 = arith.constant 0 : i32
    return %arg0, %c0_i32, %c0_i32_0 : i32, i32, i32
  }
}

</mosaic_0001>

<llo_original>
// kernel: tpu_custom_call.1
$region0: #{tpu_custom_call.1}
  #allocation0 [shape = 'u32[]', space=smem, size = 0x4, offset = 0x4, fixed_abs, tag = 'smem constant byte address 0x4 - core index']
  #allocation1 [shape = 'u32[144,128]{1,0:T(1,128)}', space=vmem, size = 0x12000, scoped, tag = 'internal scratch']
  #allocation2 [shape = 'f32[8,128]{1,0:T(8,128)}', space=vmem, size = 0x1000, scoped, tag = 'scratch operand']
  %s0 = inlined_call_operand.hbm [shape: bf16[64,128], index: 0, kind: input, shape index: {}]
  %s1 = inlined_call_operand.vmem [shape: f32[64,8], index: 1, kind: input, shape index: {}]
  %s2 = inlined_call_operand.vmem [shape: bf16[128,128], index: 2, kind: input, shape index: {}]
  %s3 = inlined_call_operand.vmem [shape: f32[1,128], index: 3, kind: input, shape index: {}]
  %s4 = inlined_call_operand.vmem [shape: f32[1,128], index: 4, kind: input, shape index: {}]
  %s5 = inlined_call_operand.hbm [shape: f32[2,8,128], index: 5, kind: output, shape index: {}]
  %s6 = sld [smem:[#allocation0]]
  $region65: #{tpu_custom_call.1} parent=0
    _
  %s8 = ssub.s32 1, %s6
  %s9 = scalar_select 0, %s8, %s6
  $region1: #{tpu_custom_call.1} parent=0
    #allocation3 [shape = 'u8[8192]{0}', space=vmem, size = 0x2000, scoped, tag = 'input window, operand 0']
    #allocation4 [shape = 's32[2]{0}', space=sflag, size = 0x8, scoped, tag = 'scoped memory for tpu_custom_call.1']
    #allocation5 [shape = 's32[2]{0}', space=sflag, size = 0x8, scoped, tag = 'scoped memory for tpu_custom_call.1']
    #allocation6 [shape = 'u8[8192]{0}', space=vmem, size = 0x2000, scoped, tag = 'output window, operand 0']
    %10 = vsyncpa [#allocation4], 0
    %s11 = scalar_lea.sflag [#allocation4], 1
    %12 = vsyncpa %s11, 0
    %13 = vsyncpa [#allocation5], 0
    %s14 = scalar_lea.sflag [#allocation5], 1
    %15 = vsyncpa %s14, 0
    loop: start=0, step=1, limit=6
    $region2: #{tpu_custom_call.1} parent=1 // loop_pre_header
      _
    $region3: #{tpu_custom_call.1} parent=1 // loop_header
      %s17 = sphi 0, %s21
      %p18 = scmp.ge.s32.totalorder %s17, 6
      %s24 = sphi 0, %s36
      %s25 = sphi 0, %s32
      %s26 = sphi 0, %s24
      %s27 = sphi 0, %s25
      %s28 = sphi 0, %s26
      %s29 = sphi 0, %s27
      %s43 = sphi 0, %s45
      %s46 = sphi 0, %s43
      %s47 = sphi 0, %s46
      %s63 = sphi 0, %s47
      %s73 = sphi 0, %s75
      %s76 = sphi 0, %s73
      %s77 = sphi 0, %s76
      %s93 = sphi 0, %s77
      %s97 = sphi 0, %s97
      %s99 = sphi 0, %s97
      %s100 = sphi 0, %s99
      %s114 = sphi 0, %s100
      %s118 = sphi 0, %s118
      %s120 = sphi 0, %s118
      %s121 = sphi 0, %s120
      %s135 = sphi 0, %s121
      %s139 = sphi 0, %s139
      %s141 = sphi 0, %s139
      %s142 = sphi 0, %s141
      %s156 = sphi 0, %s142
      %s162 = sphi 0, %s164
      %s165 = sphi 0, %s162
      %s166 = sphi 0, %s165
      %s182 = sphi 0, %s166
    $region4: #{tpu_custom_call.1} parent=1 // loop_header_branch
      %20 = sbr.rel (%p18) target = $region8
    $region5: #{tpu_custom_call.1} parent=1 // loop_body
      %s22 = ssub.s32 %s17, 1
      %s23 = ssub.s32 %s17, 2
      %s30 = sadd.s32 1, %s25
      %p31 = scmp.ge.s32.totalorder %s30, 2
      %s32 = scalar_select %p31, 0, %s30
      %s33 = sadd.s32 1, %s24
      %s34 = scalar_select %p31, %s33, %s24
      %p35 = scmp.ge.s32.totalorder %s34, 2
      %s36 = scalar_select %p35, 0, %s34
      %s37 = smul.u32 %s24, 2
      %s38 = sadd.s32 %s37, %s25
      %s39 = smul.u32 %s36, 2
      %s40 = sadd.s32 %s39, %s32
      %s41 = ssub.s32 %s38, %s40
      %p42 = scmp.eq.s32.totalorder %s41, 0
      %s44 = sadd.s32 %s43, 1
      %s45 = scalar_select %p42, %s43, %s44
      %p48 = pneg %p42
      %p49 = scmp.eq.s32.totalorder %s17, 3
      %p50 = por %p48, %p49
      %p51 = scmp.ne.s32.totalorder %s43, %s46
      %p52 = scmp.eq.s32.totalorder %s17, 0
      %p53 = por %p51, %p52
      %p54 = scmp.ne.s32.totalorder %s43, %s46
      %p55 = scmp.eq.s32.totalorder %s22, 3
      %p56 = por %p54, %p55
      %p57 = scmp.ne.s32.totalorder %s46, %s47
      %p58 = scmp.eq.s32.totalorder %s22, 0
      %p59 = por %p57, %p58
      %p60 = scmp.ne.s32.totalorder %s46, %s47
      %p61 = scmp.eq.s32.totalorder %s23, 3
      %p62 = por %p60, %p61
      %p64 = scmp.ne.s32.totalorder %s47, %s63
      %p65 = scmp.eq.s32.totalorder %s23, 0
      %p66 = por %p64, %p65
      %s67 = smul.u32 %s24, 2
      %s68 = sadd.s32 %s67, %s25
      %s69 = smul.u32 %s36, 2
      %s70 = sadd.s32 %s69, %s32
      %s71 = ssub.s32 %s68, %s70
      %p72 = scmp.eq.s32.totalorder %s71, 0
      %s74 = sadd.s32 %s73, 1
      %s75 = scalar_select %p72, %s73, %s74
      %p78 = pneg %p72
      %p79 = scmp.eq.s32.totalorder %s17, 3
      %p80 = por %p78, %p79
      %p81 = scmp.ne.s32.totalorder %s73, %s76
      %p82 = scmp.eq.s32.totalorder %s17, 0
      %p83 = por %p81, %p82
      %p84 = scmp.ne.s32.totalorder %s73, %s76
      %p85 = scmp.eq.s32.totalorder %s22, 3
      %p86 = por %p84, %p85
      %p87 = scmp.ne.s32.totalorder %s76, %s77
      %p88 = scmp.eq.s32.totalorder %s22, 0
      %p89 = por %p87, %p88
      %p90 = scmp.ne.s32.totalorder %s76, %s77
      %p91 = scmp.eq.s32.totalorder %s23, 3
      %p92 = por %p90, %p91
      %p94 = scmp.ne.s32.totalorder %s77, %s93
      %p95 = scmp.eq.s32.totalorder %s23, 0
      %p96 = por %p94, %p95
      %s98 = sadd.s32 %s97, 1
      %p101 = scmp.eq.s32.totalorder %s17, 3
      %p102 = scmp.ne.s32.totalorder %s97, %s99
      %p103 = scmp.eq.s32.totalorder %s17, 0
      %p104 = por %p102, %p103
      %p105 = scmp.ne.s32.totalorder %s97, %s99
      %p106 = scmp.eq.s32.totalorder %s22, 3
      %p107 = por %p105, %p106
      %p108 = scmp.ne.s32.totalorder %s99, %s100
      %p109 = scmp.eq.s32.totalorder %s22, 0
      %p110 = por %p108, %p109
      %p111 = scmp.ne.s32.totalorder %s99, %s100
      %p112 = scmp.eq.s32.totalorder %s23, 3
      %p113 = por %p111, %p112
      %p115 = scmp.ne.s32.totalorder %s100, %s114
      %p116 = scmp.eq.s32.totalorder %s23, 0
      %p117 = por %p115, %p116
      %s119 = sadd.s32 %s118, 1
      %p122 = scmp.eq.s32.totalorder %s17, 3
      %p123 = scmp.ne.s32.totalorder %s118, %s120
      %p124 = scmp.eq.s32.totalorder %s17, 0
      %p125 = por %p123, %p124
      %p126 = scmp.ne.s32.totalorder %s118, %s120
      %p127 = scmp.eq.s32.totalorder %s22, 3
      %p128 = por %p126, %p127
      %p129 = scmp.ne.s32.totalorder %s120, %s121
      %p130 = scmp.eq.s32.totalorder %s22, 0
      %p131 = por %p129, %p130
      %p132 = scmp.ne.s32.totalorder %s120, %s121
      %p133 = scmp.eq.s32.totalorder %s23, 3
      %p134 = por %p132, %p133
      %p136 = scmp.ne.s32.totalorder %s121, %s135
      %p137 = scmp.eq.s32.totalorder %s23, 0
      %p138 = por %p136, %p137
      %s140 = sadd.s32 %s139, 1
      %p143 = scmp.eq.s32.totalorder %s17, 3
      %p144 = scmp.ne.s32.totalorder %s139, %s141
      %p145 = scmp.eq.s32.totalorder %s17, 0
      %p146 = por %p144, %p145
      %p147 = scmp.ne.s32.totalorder %s139, %s141
      %p148 = scmp.eq.s32.totalorder %s22, 3
      %p149 = por %p147, %p148
      %p150 = scmp.ne.s32.totalorder %s141, %s142
      %p151 = scmp.eq.s32.totalorder %s22, 0
      %p152 = por %p150, %p151
      %p153 = scmp.ne.s32.totalorder %s141, %s142
      %p154 = scmp.eq.s32.totalorder %s23, 3
      %p155 = por %p153, %p154
      %p157 = scmp.ne.s32.totalorder %s142, %s156
      %p158 = scmp.eq.s32.totalorder %s23, 0
      %p159 = por %p157, %p158
      %s160 = ssub.s32 %s24, %s36
      %p161 = scmp.eq.s32.totalorder %s160, 0
      %s163 = sadd.s32 %s162, 1
      %s164 = scalar_select %p161, %s162, %s163
      %p167 = pneg %p161
      %p168 = scmp.eq.s32.totalorder %s17, 3
      %p169 = por %p167, %p168
      %p170 = scmp.ne.s32.totalorder %s162, %s165
      %p171 = scmp.eq.s32.totalorder %s17, 0
      %p172 = por %p170, %p171
      %p173 = scmp.ne.s32.totalorder %s162, %s165
      %p174 = scmp.eq.s32.totalorder %s22, 3
      %p175 = por %p173, %p174
      %p176 = scmp.ne.s32.totalorder %s165, %s166
      %p177 = scmp.eq.s32.totalorder %s22, 0
      %p178 = por %p176, %p177
      %p179 = scmp.ne.s32.totalorder %s165, %s166
      %p180 = scmp.eq.s32.totalorder %s23, 3
      %p181 = por %p179, %p180
      %p183 = scmp.ne.s32.totalorder %s166, %s182
      %p184 = scmp.eq.s32.totalorder %s23, 0
      %p185 = por %p183, %p184
      %p186 = scmp.le.s32.totalorder 1, %s17
      %p187 = scmp.lt.s32.totalorder %s17, 5
      %p188 = pnand %p186, %p187
      %p189 = pneg %p188
      // Predicated region
      $region9: #{tpu_custom_call.1} parent=5 // pred_check
        _
      $region10: #{tpu_custom_call.1} parent=5 // pred_check_branch
        %191 = sbr.rel (%p188) target = $region12
      $region11: #{tpu_custom_call.1} parent=5 // pred_region
        %s192 = ssub.s32 %s17, 1
        // Predicated region
        $region13: #{tpu_custom_call.1} parent=11 // pred_check
          %p193 = pneg %p110
        $region14: #{tpu_custom_call.1} parent=11 // pred_check_branch
          %195 = sbr.rel (%p193) target = $region16
        $region15: #{tpu_custom_call.1} parent=11 // pred_region
          _
        $region16: #{tpu_custom_call.1} parent=11 // pred_fallthru
          _
        // Predicated region
        $region17: #{tpu_custom_call.1} parent=11 // pred_check
          %p196 = pneg %p131
        $region18: #{tpu_custom_call.1} parent=11 // pred_check_branch
          %198 = sbr.rel (%p196) target = $region20
        $region19: #{tpu_custom_call.1} parent=11 // pred_region
          _
        $region20: #{tpu_custom_call.1} parent=11 // pred_fallthru
          _
        // Predicated region
        $region21: #{tpu_custom_call.1} parent=11 // pred_check
          %p199 = pneg %p152
        $region22: #{tpu_custom_call.1} parent=11 // pred_check_branch
          %201 = sbr.rel (%p199) target = $region24
        $region23: #{tpu_custom_call.1} parent=11 // pred_region
          _
        $region24: #{tpu_custom_call.1} parent=11 // pred_fallthru
          _
      $region12: #{tpu_custom_call.1} parent=5 // pred_fallthru
        _
      %p202 = scmp.lt.s32.totalorder %s17, 4
      // Predicated region
      $region25: #{tpu_custom_call.1} parent=5 // pred_check
        %p203 = pneg %p202
      $region26: #{tpu_custom_call.1} parent=5 // pred_check_branch
        %205 = sbr.rel (%p203) target = $region28
      $region27: #{tpu_custom_call.1} parent=5 // pred_region
        // Predicated region
        $region29: #{tpu_custom_call.1} parent=27 // pred_check
          %p206 = pneg %p53
        $region30: #{tpu_custom_call.1} parent=27 // pred_check_branch
          %208 = sbr.rel (%p206) target = $region32
        $region31: #{tpu_custom_call.1} parent=27 // pred_region
          %s209 = sand.u32 %s43, 1
          %s210 = scalar_lea.sflag [#allocation4], %s209
          %s211 = sand.u32 %s43, 1
          %s212 = smul.addr %s211, 8
          %s213 = scalar_lea.vmem [#allocation3], %s212
          %s214 = smul.u32 %s24, 2
          %s215 = sadd.s32 %s214, %s25
          %s216 = smul.u32 2, %s215
          %s218 = ssub.s32 128, 128
          %219 = vsyncadd %s210, %s218
          %s220 = smul.addr %s216, 64
          %s221 = scalar_lea.hbm %s0, %s220
          %s222 = sshll.u32 %s213, 4
          %s223 = int_to_ptr.vmem [resolvable:$true] %s222
          %228 = dma.hbm_to_vmem [thread:$0]  %s221, 128, %s223, %s210, 64, 64, 4
        $region32: #{tpu_custom_call.1} parent=27 // pred_fallthru
          _
        // Predicated region
        $region33: #{tpu_custom_call.1} parent=27 // pred_check
          %p229 = pneg %p83
        $region34: #{tpu_custom_call.1} parent=27 // pred_check_branch
          %231 = sbr.rel (%p229) target = $region36
        $region35: #{tpu_custom_call.1} parent=27 // pred_region
          %s232 = smul.u32 %s24, 2
          %s233 = sadd.s32 %s232, %s25
          %s234 = smul.u32 2, %s233
          %p235 = scmp.lt.s32.totalorder %s234, 7
          %s236 = scalar_select %p235, %s234, 7
          %s237 = smul.addr %s236, 8
          %s238 = scalar_lea.vmem %s1, %s237
          %s239 = smul.u32 %s24, 2
          %s240 = sadd.s32 %s239, %s25
          %s241 = smul.u32 2, %s240
        $region36: #{tpu_custom_call.1} parent=27 // pred_fallthru
          _
      $region28: #{tpu_custom_call.1} parent=5 // pred_fallthru
        _
      %p242 = scmp.le.s32.totalorder 1, %s17
      %p243 = scmp.lt.s32.totalorder %s17, 5
      %p244 = pnand %p242, %p243
      %p245 = pneg %p244
      // Predicated region
      $region37: #{tpu_custom_call.1} parent=5 // pred_check
        _
      $region38: #{tpu_custom_call.1} parent=5 // pred_check_branch
        %247 = sbr.rel (%p244) target = $region40
      $region39: #{tpu_custom_call.1} parent=5 // pred_region
        %s248 = ssub.s32 %s17, 1
        %s249 = sand.u32 %s46, 1
        %s250 = scalar_lea.sflag [#allocation4], %s249
        %s251 = sand.u32 %s46, 1
        %s252 = smul.addr %s251, 8
        %s253 = scalar_lea.vmem [#allocation3], %s252
        // Predicated region
        $region41: #{tpu_custom_call.1} parent=39 // pred_check
          %p254 = pneg %p59
        $region42: #{tpu_custom_call.1} parent=39 // pred_check_branch
          %256 = sbr.rel (%p254) target = $region44
        $region43: #{tpu_custom_call.1} parent=39 // pred_region
          %257 = dma.done %s250, 128
        $region44: #{tpu_custom_call.1} parent=39 // pred_fallthru
          _
        %s258 = sand.u32 %s46, 1
        %s259 = scalar_lea.sflag [#allocation4], %s258
        %s260 = sand.u32 %s46, 1
        %s261 = smul.addr %s260, 8
        %s262 = scalar_lea.vmem [#allocation3], %s261
        %p263 = pneg %p59
        %p264 = pneg %p56
        %s265 = smul.u32 %s26, 2
        %s266 = sadd.s32 %s265, %s27
        %s267 = smul.u32 2, %s266
        %p268 = scmp.lt.s32.totalorder %s267, 7
        %s269 = scalar_select %p268, %s267, 7
        %s270 = smul.addr %s269, 8
        %s271 = scalar_lea.vmem %s1, %s270
        %p272 = pneg %p89
        %p273 = pneg %p86
        %p274 = pneg %p110
        %p275 = pneg %p107
        %p276 = pneg %p131
        %p277 = pneg %p128
        %p278 = pneg %p152
        %p279 = pneg %p149
        %p280 = pneg %p178
        %p281 = pneg %p175
        %s282 = sand.u32 %s165, 1
        %s283 = scalar_lea.sflag [#allocation5], %s282
        %s284 = sand.u32 %s165, 1
        %s285 = smul.addr %s284, 8
        %s286 = scalar_lea.vmem [#allocation6], %s285
        %s287 = smul.u32 %s26, 2
        %s288 = sadd.s32 %s287, %s27
        %s289 = smul.u32 2, %s288
        %s290 = smul.u32 %s26, 2
        %s291 = sadd.s32 %s290, %s27
        %s292 = smul.u32 2, %s291
        %p293 = scmp.lt.s32.totalorder %s292, 7
        %s294 = scalar_select %p293, %s292, 7
        %s295 = smul.addr %s294, 8
        %s296 = scalar_lea.vmem %s1, %s295
        %s297 = smul.u32 %s26, 2
        %s298 = sadd.s32 %s297, %s27
        %s299 = smul.u32 2, %s298
        %p302 = scmp.eq.s32.totalorder %s27, 0
        // Predicated region
        $region45: #{tpu_custom_call.1} parent=39 // pred_check
          %p303 = pneg %p302
        $region46: #{tpu_custom_call.1} parent=39 // pred_check_branch
          %305 = sbr.rel (%p303) target = $region48
        $region47: #{tpu_custom_call.1} parent=39 // pred_region
          %306 = vst [vmem:[#allocation2] sm:$0xff] 0.0
        $region48: #{tpu_custom_call.1} parent=39 // pred_fallthru
          _
        %v307 = vld [vmem:[%s253] sm:$0xf]
        %v308 = vld [vmem:[%s253 + $0x4] sm:$0xf]
        %v309 = vxor.u32 %v307, 2147516416
        %v310 = vxor.u32 %v308, 2147516416
        %v312 = vmul.bf16 %v309, 1069105081
        %v313 = vpow.bf16.pop %v312
        %v315 = vmul.bf16 %v310, 1069105081
        %v316 = vpow.bf16.pop %v315
        %v317 = vadd.bf16 %v313, 1065369472
        %v318 = vadd.bf16 %v316, 1065369472
        %v319 = vrcp.bf16.pop %v317
        %v320 = vmul.bf16 1065369472, %v319
        %v321 = vrcp.bf16.pop %v318
        %v322 = vmul.bf16 1065369472, %v321
        %v323 = vmul.bf16 %v307, %v320
        %v324 = vmul.bf16 %v308, %v322
        %v325 = vld [vmem:[%s2] sm:$0xf]
        %v326 = vld [vmem:[%s2 + $0x4] sm:$0xf]
        %v327 = vld [vmem:[%s2 + $0x8] sm:$0xf]
        %v328 = vld [vmem:[%s2 + $0xc] sm:$0xf]
        %v329 = vld [vmem:[%s2 + $0x10] sm:$0xf]
        %v330 = vld [vmem:[%s2 + $0x14] sm:$0xf]
        %v331 = vld [vmem:[%s2 + $0x18] sm:$0xf]
        %v332 = vld [vmem:[%s2 + $0x1c] sm:$0xf]
        %v333 = vld [vmem:[%s2 + $0x20] sm:$0xf]
        %v334 = vld [vmem:[%s2 + $0x24] sm:$0xf]
        %v335 = vld [vmem:[%s2 + $0x28] sm:$0xf]
        %v336 = vld [vmem:[%s2 + $0x2c] sm:$0xf]
        %v337 = vld [vmem:[%s2 + $0x30] sm:$0xf]
        %v338 = vld [vmem:[%s2 + $0x34] sm:$0xf]
        %v339 = vld [vmem:[%s2 + $0x38] sm:$0xf]
        %v340 = vld [vmem:[%s2 + $0x3c] sm:$0xf]
        %v341 = vld [vmem:[%s3] sm:$0x1]
        %v343 = vlaneseq
        %v344 = vshrl.u32 %v343, 7
        %v345 = vsub.s32 0, %v344
        %v346 = vrot.slane %v341, %v345
        %v350 = vunpack.c.l.b16 %v323
        %v351 = vunpack.c.l.b16 %v324
        %v352 = vpack.c.b16 %v351, %v350
        %v370 = vunpack.c.l.b16 %v325
        %v371 = vunpack.c.l.b16 %v326
        %v372 = vunpack.c.l.b16 %v327
        %v373 = vunpack.c.l.b16 %v328
        %v374 = vunpack.c.l.b16 %v329
        %v375 = vunpack.c.l.b16 %v330
        %v376 = vunpack.c.l.b16 %v331
        %v377 = vunpack.c.l.b16 %v332
        %v378 = vunpack.c.l.b16 %v333
        %v379 = vunpack.c.l.b16 %v334
        %v380 = vunpack.c.l.b16 %v335
        %v381 = vunpack.c.l.b16 %v336
        %v382 = vunpack.c.l.b16 %v337
        %v383 = vunpack.c.l.b16 %v338
        %v384 = vunpack.c.l.b16 %v339
        %v385 = vunpack.c.l.b16 %v340
        %v386 = vpack.c.b16 %v371, %v370
        %v387 = vpack.c.b16 %v373, %v372
        %v388 = vpack.c.b16 %v375, %v374
        %v389 = vpack.c.b16 %v377, %v376
        %v390 = vpack.c.b16 %v379, %v378
        %v391 = vpack.c.b16 %v381, %v380
        %v392 = vpack.c.b16 %v383, %v382
        %v393 = vpack.c.b16 %v385, %v384
        %402 = vmatprep.subr.bf16.mxu0 0
        %403 = vmatpush1.bf16.msra.mxu0 %v386
        %404 = vmatprep.subr.bf16.mxu0 0
        %405 = vmatpush1.bf16.msra.mxu0 %v387
        %406 = vmatprep.subr.bf16.mxu0 0
        %407 = vmatpush1.bf16.msra.mxu0 %v388
        %408 = vmatprep.subr.bf16.mxu0 0
        %409 = vmatpush1.bf16.msra.mxu0 %v389
        %410 = vmatprep.subr.bf16.mxu0 0
        %411 = vmatpush1.bf16.msra.mxu0 %v390
        %412 = vmatprep.subr.bf16.mxu0 0
        %413 = vmatpush1.bf16.msra.mxu0 %v391
        %414 = vmatprep.subr.bf16.mxu0 0
        %415 = vmatpush1.bf16.msra.mxu0 %v392
        %416 = vmatprep.subr.bf16.mxu0 0
        %417 = vmatpush1.bf16.msra.mxu0 %v393
        %418 = vmatprep.subr.bf16.mxu0 0
        %419 = vmatpush1.bf16.msra.mxu0 0
        %420 = vmatprep.subr.bf16.mxu0 0
        %421 = vmatpush1.bf16.msra.mxu0 0
        %422 = vmatprep.subr.bf16.mxu0 0
        %423 = vmatpush1.bf16.msra.mxu0 0
        %424 = vmatprep.subr.bf16.mxu0 0
        %425 = vmatpush1.bf16.msra.mxu0 0
        %426 = vmatprep.subr.bf16.mxu0 0
        %427 = vmatpush1.bf16.msra.mxu0 0
        %428 = vmatprep.subr.bf16.mxu0 0
        %429 = vmatpush1.bf16.msra.mxu0 0
        %430 = vmatprep.subr.bf16.mxu0 0
        %431 = vmatpush1.bf16.msra.mxu0 0
        %432 = vmatprep.subr.bf16.mxu0 0
        %433 = vmatpush1.bf16.msra.mxu0 0
        %434 = vmatprep.mubr.bf16.mxu0 0
        %435 = vmatmul.mubr.bf16.gmra.mrb[0].mxu0 %v352
        %v436 = vpop.f32.mrb[0].mxu0
        %v437 = vadd.f32 %v346, %v436
        %v438 = vpop.f32.mrb[0].mxu0
        %v439 = vpop.f32.mrb[0].mxu0
        %v440 = vadd.f32 %v346, %v439
        %v441 = vpop.f32.mrb[0].mxu0
        %442 = vdwg.mxu0
        %v443 = vxor.u32 %v437, 2147483648
        %v444 = vxor.u32 %v440, 2147483648
        %v445 = vmul.f32 %v443, 1.442695
        %v446 = vpow.pop %v445
        %v447 = vmul.f32 %v444, 1.442695
        %v448 = vpow.pop %v447
        %v449 = vadd.f32 %v446, 1.0
        %v450 = vadd.f32 %v448, 1.0
        %v451 = vrcp.pop %v449
        %v452 = vmul.f32 1.0, %v451
        %v453 = vrcp.pop %v450
        %v454 = vmul.f32 1.0, %v453
        %v455 = vmul.f32 %v437, %v452
        %v456 = vmul.f32 %v440, %v454
        %v457 = vld [vmem:[%s4] sm:$0x1]
        %v459 = vlaneseq
        %v460 = vshrl.u32 %v459, 7
        %v461 = vsub.s32 0, %v460
        %v462 = vrot.slane %v457, %v461
        %v464 = vmul.f32 %v455, %v462
        %v465 = vmul.f32 %v456, %v462
        %466 = vadd.xlane.f32.xlu0 %v464
        %v467 = vpop.xlane.xlu0 %466
        %468 = vadd.xlane.f32.xlu0 %v465
        %v469 = vpop.xlane.xlu0 %468
        %v470 = vld [vmem:[%s296] sm:$0xff]
        %v471 = vld [vmem:[%s296 + $0x8] sm:$0xff]
        %v472 = vlaneseq
        %v473 = vand.u32 %v472, 127
        %vm474 = vcmp.lt.s32.totalorder %v473, 3
        %vm475 = vcmp.eq.s32.totalorder %v473, 3
        %v476 = vsel %vm475, 1.0, 0.0
        %v477 = vsel %vm474, %v467, %v476
        %v478 = vsel %vm474, %v469, %v476
        %v479 = vmul.f32 %v470, %v477
        %v480 = vmul.f32 %v471, %v478
        %v481 = vpack.c.bf16 %v480, %v479
        %v482 = vunpack.c.l.bf16 %v481
        %v483 = vunpack.c.h.bf16 %v481
        %v484 = vsub.f32 %v479, %v482
        %v485 = vsub.f32 %v480, %v483
        %v486 = vpack.c.bf16 %v485, %v484
        %488 = vrot.lane.b32.xlu0 %v486, 8
        %v489 = vpop.permute.xlu0 %488
        %vm490 = vcmask 64512
        %v493 = vsel %vm490, %v481, %v489
        %v495 = vcvt.f32.s32.to.zero.pseudo %v470
        %v496 = vcvt.f32.s32.to.zero.pseudo %v471
        %497 = vset.pattern.permute.xlu0 4
        %498 = vperm.xlu0 %497, %v495
        %v499 = vpop.permute.xlu0 %498
        %500 = vset.pattern.permute.xlu0 4
        %501 = vperm.xlu0 %500, %v496
        %v502 = vpop.permute.xlu0 %501
        %vm503 = vcmp.eq.s32.totalorder %v499, %v473
        %vm504 = vcmp.eq.s32.totalorder %v502, %v473
        %v505 = vsel %vm503, 1, 0
        %v506 = vsel %vm504, 1, 0
        %v507 = vcvt.s32.f32 %v505
        %v508 = vcvt.s32.f32 %v506
        %v509 = vpack.c.bf16 %v508, %v507
        %510 = vxpose.xlu0.c.b16.start [1/8] %v493, 128
        %511 = vxpose.xlu0.c.b16.cont [2/8] 0, 128
        %512 = vxpose.xlu0.c.b16.cont [3/8] 0, 128
        %513 = vxpose.xlu0.c.b16.cont [4/8] 0, 128
        %514 = vxpose.xlu0.c.b16.cont [5/8] 0, 128
        %515 = vxpose.xlu0.c.b16.cont [6/8] 0, 128
        %516 = vxpose.xlu0.c.b16.cont [7/8] 0, 128
        %517 = vxpose.xlu0.c.b16.end [8/8] 0, 128
        %v518 = vpop.trf.xlu0
        %v519 = vpop.trf.xlu0
        %v520 = vpop.trf.xlu0
        %v521 = vpop.trf.xlu0
        %v522 = vpop.trf.xlu0
        %v523 = vpop.trf.xlu0
        %v524 = vpop.trf.xlu0
        %v525 = vpop.trf.xlu0
        %vm526 = vcmask 130048
        %v528 = vsel %vm526, %v518, 0
        %530 = vmatprep.subr.bf16.mxu0 0
        %531 = vmatpush1.bf16.msra.mxu0 %v509
        %532 = vmatprep.subr.bf16.mxu0 0
        %533 = vmatpush1.bf16.msra.mxu0 0
        %534 = vmatprep.subr.bf16.mxu0 0
        %535 = vmatpush1.bf16.msra.mxu0 0
        %536 = vmatprep.subr.bf16.mxu0 0
        %537 = vmatpush1.bf16.msra.mxu0 0
        %538 = vmatprep.subr.bf16.mxu0 0
        %539 = vmatpush1.bf16.msra.mxu0 0
        %540 = vmatprep.subr.bf16.mxu0 0
        %541 = vmatpush1.bf16.msra.mxu0 0
        %542 = vmatprep.subr.bf16.mxu0 0
        %543 = vmatpush1.bf16.msra.mxu0 0
        %544 = vmatprep.subr.bf16.mxu0 0
        %545 = vmatpush1.bf16.msra.mxu0 0
        %546 = vmatprep.subr.bf16.mxu0 0
        %547 = vmatpush1.bf16.msra.mxu0 0
        %548 = vmatprep.subr.bf16.mxu0 0
        %549 = vmatpush1.bf16.msra.mxu0 0
        %550 = vmatprep.subr.bf16.mxu0 0
        %551 = vmatpush1.bf16.msra.mxu0 0
        %552 = vmatprep.subr.bf16.mxu0 0
        %553 = vmatpush1.bf16.msra.mxu0 0
        %554 = vmatprep.subr.bf16.mxu0 0
        %555 = vmatpush1.bf16.msra.mxu0 0
        %556 = vmatprep.subr.bf16.mxu0 0
        %557 = vmatpush1.bf16.msra.mxu0 0
        %558 = vmatprep.subr.bf16.mxu0 0
        %559 = vmatpush1.bf16.msra.mxu0 0
        %560 = vmatprep.subr.bf16.mxu0 0
        %561 = vmatpush1.bf16.msra.mxu0 0
        %562 = vmatprep.mubr.bf16.mxu0 0
        %563 = vmatmul.mubr.bf16.gmra.mrb[0].mxu0 %v528
        %v564 = vpop.f32.mrb[0].mxu0
        %v565 = vadd.f32 0.0, %v564
        %v566 = vpop.f32.mrb[0].mxu0
        %v567 = vpop.f32.mrb[0].mxu0
        %v568 = vadd.f32 0.0, %v567
        %v569 = vpop.f32.mrb[0].mxu0
        %570 = vdwg.mxu0
        %v571 = vld [vmem:[#allocation2] sm:$0xff]
        %v572 = vadd.f32 %v565, %v568
        %v573 = vadd.f32 %v571, %v572
        %574 = vst [vmem:[#allocation2] sm:$0xff] %v573
        %p575 = scmp.eq.s32.totalorder %s27, 1
        // Predicated region
        $region49: #{tpu_custom_call.1} parent=39 // pred_check
          %p576 = pneg %p575
        $region50: #{tpu_custom_call.1} parent=39 // pred_check_branch
          %578 = sbr.rel (%p576) target = $region52
        $region51: #{tpu_custom_call.1} parent=39 // pred_region
          %v579 = vld [vmem:[#allocation2] sm:$0xff]
          %580 = vst [vmem:[%s286] sm:$0xff] %v579
        $region52: #{tpu_custom_call.1} parent=39 // pred_fallthru
          _
        %s581 = sand.u32 %s165, 1
        %s582 = scalar_lea.sflag [#allocation5], %s581
        %s583 = sand.u32 %s165, 1
        %s584 = smul.addr %s583, 8
        %s585 = scalar_lea.vmem [#allocation6], %s584
        // Predicated region
        $region53: #{tpu_custom_call.1} parent=39 // pred_check
          %p586 = pneg %p175
        $region54: #{tpu_custom_call.1} parent=39 // pred_check_branch
          %588 = sbr.rel (%p586) target = $region56
        $region55: #{tpu_custom_call.1} parent=39 // pred_region
          %s590 = ssub.s32 128, 128
          %591 = vsyncadd %s582, %s590
          %s592 = smul.addr %s26, 128
          %s593 = scalar_lea.hbm %s5, %s592
          %s595 = sshll.u32 %s585, 4
          %s596 = int_to_ptr.vmem [resolvable:$true] %s595
          %598 = dma.vmem_to_hbm [thread:$0]  %s596, 128, %s593, %s582
        $region56: #{tpu_custom_call.1} parent=39 // pred_fallthru
          _
      $region40: #{tpu_custom_call.1} parent=5 // pred_fallthru
        _
      %p599 = scmp.le.s32.totalorder 2, %s17
      // Predicated region
      $region57: #{tpu_custom_call.1} parent=5 // pred_check
        %p600 = pneg %p599
      $region58: #{tpu_custom_call.1} parent=5 // pred_check_branch
        %602 = sbr.rel (%p600) target = $region60
      $region59: #{tpu_custom_call.1} parent=5 // pred_region
        %s603 = ssub.s32 %s17, 2
        // Predicated region
        $region61: #{tpu_custom_call.1} parent=59 // pred_check
          %p604 = pneg %p181
        $region62: #{tpu_custom_call.1} parent=59 // pred_check_branch
          %606 = sbr.rel (%p604) target = $region64
        $region63: #{tpu_custom_call.1} parent=59 // pred_region
          %s607 = sand.u32 %s166, 1
          %s608 = scalar_lea.sflag [#allocation5], %s607
          %s609 = sand.u32 %s166, 1
          %s610 = smul.addr %s609, 8
          %s611 = scalar_lea.vmem [#allocation6], %s610
          %612 = dma.done %s608, 128
        $region64: #{tpu_custom_call.1} parent=59 // pred_fallthru
          _
      $region60: #{tpu_custom_call.1} parent=5 // pred_fallthru
        _
    $region6: #{tpu_custom_call.1} parent=1 // loop_footer
      %s21 = sadd.s32 1, %s17
    $region7: #{tpu_custom_call.1} parent=1 // loop_footer_branch
      %16 = sbr.rel target = $region3
    $region8: #{tpu_custom_call.1} parent=1 // loop_exit
      _
    %613 = vsyncpa [#allocation4], 1
    %s614 = scalar_lea.sflag [#allocation4], 1
    %615 = vsyncpa %s614, 1
    %616 = vsyncpa [#allocation5], 1
    %s617 = scalar_lea.sflag [#allocation5], 1
    %618 = vsyncpa %s617, 1

</llo_original>
